<compile_context>
chip_gen: v6e
topology: v6e:2x2x1
jax: 0.10.0
libtpu: 0.0.40
codegen_flags: <defaults>
</compile_context>

<pallas_src>
import math
import functools

import jax
import jax.numpy as jnp
from jax.experimental import pallas as pl
from jax.experimental.pallas import tpu as pltpu

INPUT_DIM = 361
LATENT_DIM = 10
H1, H2, H3 = 90, 70, 40
HEAD_DIM = 2 * LATENT_DIM          # fused [mean | log_var] head
PAD = 128                          # lane-padded hidden width used in-kernel

SOFTPLUS_BETA = 3.0
SOFTPLUS_INV_BETA = 1.0 / SOFTPLUS_BETA
SOFTPLUS_THRESHOLD = 20.0          # PyTorch nn.Softplus default threshold

MAX_BATCH_TILE = 2048              # ~3 MB f32 x-tile; x2 buffers + out + weights
                                   # ~= 12 MB, fits every generation's VMEM.
VMEM_LIMIT_BYTES = 32 * 1024 * 1024


def _round_up(x, m):
    return (x + m - 1) // m * m


def _softplus_beta(x):
    # PyTorch: (1/beta)*log(1+exp(beta*x)); identity where beta*x > threshold.
    # Clamp (instead of select) keeps exp finite; the outer where uses the
    # un-clamped value so threshold semantics are exact.
    bx = SOFTPLUS_BETA * x
    sp = SOFTPLUS_INV_BETA * jnp.log1p(jnp.exp(jnp.minimum(bx, SOFTPLUS_THRESHOLD)))
    return jnp.where(bx > SOFTPLUS_THRESHOLD, x, sp)


def encoder_kernel(x_ref, w1_ref, wstack_ref, bstack_ref, out_ref):
    b = bstack_ref[...]                               # (8, 128) f32: b1,b2,b3,bhead

    # Layer 1: (TB,361)bf16 @ (361,128)bf16 -> f32.  Padded cols (>=90) get a
    # zero bias; the next layer's padded weight rows are zero, so padding is
    # mathematically inert.
    x = x_ref[...].astype(jnp.bfloat16)
    h = jnp.dot(x, w1_ref[...], preferred_element_type=jnp.float32) + b[0:1, :]
    h = _softplus_beta(h)

    # Layer 2
    h = jnp.dot(h.astype(jnp.bfloat16), wstack_ref[0],
                preferred_element_type=jnp.float32) + b[1:2, :]
    h = _softplus_beta(h)

    # Layer 3
    h = jnp.dot(h.astype(jnp.bfloat16), wstack_ref[1],
                preferred_element_type=jnp.float32) + b[2:3, :]
    h = _softplus_beta(h)

    # Fused mean|log_var head (no activation).  Full 128-wide lane-dense store;
    # columns >= 20 are exactly zero (zero weight cols + zero bias).
    out_ref[...] = jnp.dot(h.astype(jnp.bfloat16), wstack_ref[2],
                           preferred_element_type=jnp.float32) + b[3:4, :]


def _pad_to(a, shape):
    pads = [(0, t - s) for s, t in zip(a.shape, shape)]
    return jnp.pad(a, pads)


def pack_encoder_params(params):
    """Pack the 10 per-layer arrays into 3 lane-padded slabs for the kernel."""
    (w1, b1), (w2, b2), (w3, b3), (wm, bm), (wv, bv) = params
    wh = jnp.concatenate([wm, wv], axis=1)     # (40, 20)
    bh = jnp.concatenate([bm, bv], axis=1)     # (1, 20)

    w1p = _pad_to(w1, (INPUT_DIM, PAD)).astype(jnp.bfloat16)    # (361, 128)
    wstack = jnp.stack(
        [_pad_to(w2, (PAD, PAD)),
         _pad_to(w3, (PAD, PAD)),
         _pad_to(wh, (PAD, PAD))], axis=0).astype(jnp.bfloat16)  # (3, 128, 128)
    bstack = jnp.concatenate(
        [_pad_to(b1, (1, PAD)),
         _pad_to(b2, (1, PAD)),
         _pad_to(b3, (1, PAD)),
         _pad_to(bh, (1, PAD)),
         jnp.zeros((4, PAD), jnp.float32)], axis=0)              # (8, 128) f32
    return w1p, wstack, bstack


def _choose_tiling(batch, batch_tile):
    """Tile-count-first: minimal padding (<=7 rows/tile) and >=2 grid steps
    when the batch allows it (feeds both v7x TensorCores)."""
    b8 = _round_up(batch, 8)
    n_tiles = -(-b8 // batch_tile)          # cdiv
    if n_tiles < 2 and b8 > 8:
        n_tiles = 2
    tb = _round_up(-(-b8 // n_tiles), 8)
    b_pad = n_tiles * tb
    return tb, b_pad, n_tiles


@functools.partial(jax.jit, static_argnames=("batch_tile",))
def encoder_forward(x, params, *, batch_tile=MAX_BATCH_TILE):
    """x: (B, 361) float32. Returns (mean, log_var), each (B, 10)."""
    B = x.shape[0]
    w1p, wstack, bstack = pack_encoder_params(params)

    tb, b_pad, n_tiles = _choose_tiling(B, batch_tile)
    if b_pad != B:
        x = jnp.pad(x, ((0, b_pad - B), (0, 0)))

    grid = (n_tiles,)

    # Advisory cost estimate with padded (lane-128) work, real HBM bytes.
    flops = 2 * b_pad * (INPUT_DIM * PAD + 3 * PAD * PAD)
    transcendentals = 2 * b_pad * 3 * PAD
    bytes_accessed = (4 * b_pad * INPUT_DIM              # x read (f32)
                      + 4 * b_pad * PAD                  # lane-dense out write
                      + 2 * (INPUT_DIM * PAD + 3 * PAD * PAD)   # bf16 weights
                      + 4 * 8 * PAD)                     # biases

    out = pl.pallas_call(
        encoder_kernel,
        out_shape=jax.ShapeDtypeStruct((b_pad, PAD), jnp.float32),
        grid=grid,
        in_specs=[
            pl.BlockSpec((tb, INPUT_DIM), lambda i: (i, 0)),       # x tiles
            pl.BlockSpec((INPUT_DIM, PAD), lambda i: (0, 0)),      # W1 (resident)
            pl.BlockSpec((3, PAD, PAD), lambda i: (0, 0, 0)),      # W2,W3,Whead
            pl.BlockSpec((8, PAD), lambda i: (0, 0)),              # biases
        ],
        out_specs=pl.BlockSpec((tb, PAD), lambda i: (i, 0)),       # lane-dense
        compiler_params=pltpu.CompilerParams(
            dimension_semantics=("parallel",),
            vmem_limit_bytes=VMEM_LIMIT_BYTES),
        cost_estimate=pl.CostEstimate(
            flops=flops,
            transcendentals=transcendentals,
            bytes_accessed=bytes_accessed),
    )(x, w1p, wstack, bstack)

    out = out[:B]
    return out[:, :LATENT_DIM], out[:, LATENT_DIM:HEAD_DIM]


def _init_linear(key, in_dim, out_dim):
    # Mimic PyTorch nn.Linear default init: U(-1/sqrt(in_dim), 1/sqrt(in_dim)).
    kw, kb = jax.random.split(key)
    bound = 1.0 / math.sqrt(in_dim)
    # Stored as (in, out) so the math is x @ W + b (== x @ W_pt.T + b).
    w = jax.random.uniform(kw, (in_dim, out_dim), jnp.float32, -bound, bound)
    b = jax.random.uniform(kb, (1, out_dim), jnp.float32, -bound, bound)
    return w, b


def make_encoder_params(key, input_dim=INPUT_DIM, latent_dim=LATENT_DIM):
    keys = jax.random.split(key, 5)
    return (
        _init_linear(keys[0], input_dim, H1),
        _init_linear(keys[1], H1, H2),
        _init_linear(keys[2], H2, H3),
        _init_linear(keys[3], H3, latent_dim),
        _init_linear(keys[4], H3, latent_dim),
    )


def encoder_reference(x, params):
    """Pure-JAX f32 reference for correctness checking."""
    (w1, b1), (w2, b2), (w3, b3), (wm, bm), (wv, bv) = params
    h = _softplus_beta(x @ w1 + b1)
    h = _softplus_beta(h @ w2 + b2)
    h = _softplus_beta(h @ w3 + b3)
    return h @ wm + bm, h @ wv + bv


if __name__ == "__main__":
    key = jax.random.PRNGKey(0)
    k_params, k_x = jax.random.split(key)

    params = make_encoder_params(k_params)

    B = 8
    x = jax.random.normal(k_x, (B, INPUT_DIM), dtype=jnp.float32)

    mean, log_var = encoder_forward(x, params)
    jax.block_until_ready((mean, log_var))

    ref_mean, ref_log_var = encoder_reference(x, params)
    assert mean.shape == (B, LATENT_DIM) and log_var.shape == (B, LATENT_DIM)
    # bf16 MXU operands vs f32 reference: expect ~1e-2-scale differences.
    assert jnp.allclose(mean, ref_mean, atol=3e-2, rtol=3e-2)
    assert jnp.allclose(log_var, ref_log_var, atol=3e-2, rtol=3e-2)

    print("KERNEL_OK")
</pallas_src>

<mosaic_0001>
module attributes {stable_mosaic.version = 11 : i64} {
  func.func @encoder_kernel(%arg0: i32, %arg1: memref<8x361xf32, #tpu.memory_space<vmem>>, %arg2: memref<361x128xbf16, #tpu.memory_space<vmem>>, %arg3: memref<3x128x128xbf16, #tpu.memory_space<vmem>>, %arg4: memref<8x128xf32, #tpu.memory_space<vmem>>, %arg5: memref<8x128xf32, #tpu.memory_space<vmem>>) attributes {dimension_semantics = [#tpu.dimension_semantics<parallel>], iteration_bounds = array<i64: 1>, scalar_prefetch = 0 : i64, scratch_operands = 0 : i64, tpu.core_type = #tpu.core_type<tc>, window_params = [{transform_indices = @transform_0, window_bounds = array<i64: 8, 361>}, {pipeline_mode = #tpu.pipeline_mode<synchronous>, transform_indices = @transform_1, window_bounds = array<i64: 361, 128>}, {pipeline_mode = #tpu.pipeline_mode<synchronous>, transform_indices = @transform_2, window_bounds = array<i64: 3, 128, 128>}, {pipeline_mode = #tpu.pipeline_mode<synchronous>, transform_indices = @transform_3, window_bounds = array<i64: 8, 128>}, {transform_indices = @transform_4, window_bounds = array<i64: 8, 128>}]} {
    %c0 = arith.constant 0 : index
    %c0_0 = arith.constant 0 : index
    %0 = vector.load %arg4[%c0, %c0_0] : memref<8x128xf32, #tpu.memory_space<vmem>>, vector<8x128xf32>
    %c0_1 = arith.constant 0 : index
    %c0_2 = arith.constant 0 : index
    %1 = vector.load %arg1[%c0_1, %c0_2] : memref<8x361xf32, #tpu.memory_space<vmem>>, vector<8x361xf32>
    %2 = arith.truncf %1 : vector<8x361xf32> to vector<8x361xbf16>
    %c0_3 = arith.constant 0 : index
    %c0_4 = arith.constant 0 : index
    %3 = vector.load %arg2[%c0_3, %c0_4] : memref<361x128xbf16, #tpu.memory_space<vmem>>, vector<361x128xbf16>
    %cst = arith.constant dense<0.000000e+00> : vector<8x128xf32>
    %4 = tpu.matmul %2, %3, %cst {dimension_numbers = #tpu.dot_dimension_numbers<[1], [0], [0], [1], [0, 0, 1, 1], [], []>} : vector<8x361xbf16>, vector<361x128xbf16>, vector<8x128xf32> -> vector<8x128xf32>
    %5 = vector.extract_strided_slice %0 {offsets = [0, 0], sizes = [1, 128], strides = [1, 1]} : vector<8x128xf32> to vector<1x128xf32>
    %6 = vector.broadcast %5 : vector<1x128xf32> to vector<8x128xf32>
    %7 = arith.addf %4, %6 : vector<8x128xf32>
    %cst_5 = arith.constant 3.000000e+00 : f32
    %8 = vector.broadcast %cst_5 : f32 to vector<8x128xf32>
    %9 = arith.mulf %8, %7 : vector<8x128xf32>
    %cst_6 = arith.constant 2.000000e+01 : f32
    %10 = vector.broadcast %cst_6 : f32 to vector<8x128xf32>
    %11 = arith.minimumf %9, %10 : vector<8x128xf32>
    %12 = math.exp %11 : vector<8x128xf32>
    %13 = math.log1p %12 : vector<8x128xf32>
    %cst_7 = arith.constant 0.333333343 : f32
    %14 = vector.broadcast %cst_7 : f32 to vector<8x128xf32>
    %15 = arith.mulf %14, %13 : vector<8x128xf32>
    %cst_8 = arith.constant 2.000000e+01 : f32
    %16 = vector.broadcast %cst_8 : f32 to vector<8x128xf32>
    %17 = arith.cmpf ogt, %9, %16 : vector<8x128xf32>
    %18 = arith.select %17, %7, %15 : vector<8x128xi1>, vector<8x128xf32>
    %19 = arith.truncf %18 : vector<8x128xf32> to vector<8x128xbf16>
    %c0_9 = arith.constant 0 : index
    %c0_10 = arith.constant 0 : index
    %c0_11 = arith.constant 0 : index
    %20 = vector.load %arg3[%c0_9, %c0_10, %c0_11] : memref<3x128x128xbf16, #tpu.memory_space<vmem>>, vector<1x128x128xbf16>
    %21 = vector.shape_cast %20 : vector<1x128x128xbf16> to vector<128x128xbf16>
    %cst_12 = arith.constant dense<0.000000e+00> : vector<8x128xf32>
    %22 = tpu.matmul %19, %21, %cst_12 {dimension_numbers = #tpu.dot_dimension_numbers<[1], [0], [0], [1], [0, 0, 1, 1], [], []>} : vector<8x128xbf16>, vector<128x128xbf16>, vector<8x128xf32> -> vector<8x128xf32>
    %23 = vector.extract_strided_slice %0 {offsets = [1, 0], sizes = [1, 128], strides = [1, 1]} : vector<8x128xf32> to vector<1x128xf32>
    %24 = vector.broadcast %23 : vector<1x128xf32> to vector<8x128xf32>
    %25 = arith.addf %22, %24 : vector<8x128xf32>
    %cst_13 = arith.constant 3.000000e+00 : f32
    %26 = vector.broadcast %cst_13 : f32 to vector<8x128xf32>
    %27 = arith.mulf %26, %25 : vector<8x128xf32>
    %cst_14 = arith.constant 2.000000e+01 : f32
    %28 = vector.broadcast %cst_14 : f32 to vector<8x128xf32>
    %29 = arith.minimumf %27, %28 : vector<8x128xf32>
    %30 = math.exp %29 : vector<8x128xf32>
    %31 = math.log1p %30 : vector<8x128xf32>
    %cst_15 = arith.constant 0.333333343 : f32
    %32 = vector.broadcast %cst_15 : f32 to vector<8x128xf32>
    %33 = arith.mulf %32, %31 : vector<8x128xf32>
    %cst_16 = arith.constant 2.000000e+01 : f32
    %34 = vector.broadcast %cst_16 : f32 to vector<8x128xf32>
    %35 = arith.cmpf ogt, %27, %34 : vector<8x128xf32>
    %36 = arith.select %35, %25, %33 : vector<8x128xi1>, vector<8x128xf32>
    %37 = arith.truncf %36 : vector<8x128xf32> to vector<8x128xbf16>
    %c1 = arith.constant 1 : index
    %c0_17 = arith.constant 0 : index
    %c0_18 = arith.constant 0 : index
    %38 = vector.load %arg3[%c1, %c0_17, %c0_18] : memref<3x128x128xbf16, #tpu.memory_space<vmem>>, vector<1x128x128xbf16>
    %39 = vector.shape_cast %38 : vector<1x128x128xbf16> to vector<128x128xbf16>
    %cst_19 = arith.constant dense<0.000000e+00> : vector<8x128xf32>
    %40 = tpu.matmul %37, %39, %cst_19 {dimension_numbers = #tpu.dot_dimension_numbers<[1], [0], [0], [1], [0, 0, 1, 1], [], []>} : vector<8x128xbf16>, vector<128x128xbf16>, vector<8x128xf32> -> vector<8x128xf32>
    %41 = vector.extract_strided_slice %0 {offsets = [2, 0], sizes = [1, 128], strides = [1, 1]} : vector<8x128xf32> to vector<1x128xf32>
    %42 = vector.broadcast %41 : vector<1x128xf32> to vector<8x128xf32>
    %43 = arith.addf %40, %42 : vector<8x128xf32>
    %cst_20 = arith.constant 3.000000e+00 : f32
    %44 = vector.broadcast %cst_20 : f32 to vector<8x128xf32>
    %45 = arith.mulf %44, %43 : vector<8x128xf32>
    %cst_21 = arith.constant 2.000000e+01 : f32
    %46 = vector.broadcast %cst_21 : f32 to vector<8x128xf32>
    %47 = arith.minimumf %45, %46 : vector<8x128xf32>
    %48 = math.exp %47 : vector<8x128xf32>
    %49 = math.log1p %48 : vector<8x128xf32>
    %cst_22 = arith.constant 0.333333343 : f32
    %50 = vector.broadcast %cst_22 : f32 to vector<8x128xf32>
    %51 = arith.mulf %50, %49 : vector<8x128xf32>
    %cst_23 = arith.constant 2.000000e+01 : f32
    %52 = vector.broadcast %cst_23 : f32 to vector<8x128xf32>
    %53 = arith.cmpf ogt, %45, %52 : vector<8x128xf32>
    %54 = arith.select %53, %43, %51 : vector<8x128xi1>, vector<8x128xf32>
    %55 = arith.truncf %54 : vector<8x128xf32> to vector<8x128xbf16>
    %c2 = arith.constant 2 : index
    %c0_24 = arith.constant 0 : index
    %c0_25 = arith.constant 0 : index
    %56 = vector.load %arg3[%c2, %c0_24, %c0_25] : memref<3x128x128xbf16, #tpu.memory_space<vmem>>, vector<1x128x128xbf16>
    %57 = vector.shape_cast %56 : vector<1x128x128xbf16> to vector<128x128xbf16>
    %cst_26 = arith.constant dense<0.000000e+00> : vector<8x128xf32>
    %58 = tpu.matmul %55, %57, %cst_26 {dimension_numbers = #tpu.dot_dimension_numbers<[1], [0], [0], [1], [0, 0, 1, 1], [], []>} : vector<8x128xbf16>, vector<128x128xbf16>, vector<8x128xf32> -> vector<8x128xf32>
    %59 = vector.extract_strided_slice %0 {offsets = [3, 0], sizes = [1, 128], strides = [1, 1]} : vector<8x128xf32> to vector<1x128xf32>
    %60 = vector.broadcast %59 : vector<1x128xf32> to vector<8x128xf32>
    %61 = arith.addf %58, %60 : vector<8x128xf32>
    %c0_27 = arith.constant 0 : index
    %c0_28 = arith.constant 0 : index
    %62 = vector.load %arg5[%c0_27, %c0_28] : memref<8x128xf32, #tpu.memory_space<vmem>>, vector<8x128xf32>
    tpu.vector_store %arg5[%c0_27, %c0_28], %61 {strides = array<i32>} : memref<8x128xf32, #tpu.memory_space<vmem>>, vector<8x128xf32>,
    return
  }
  func.func @transform_0(%arg0: i32) -> (i32, i32) {
    %c0_i32 = arith.constant 0 : i32
    %c0_i32_0 = arith.constant 0 : i32
    return %arg0, %c0_i32 : i32, i32
  }
  func.func @transform_1(%arg0: i32) -> (i32, i32) {
    %c0_i32 = arith.constant 0 : i32
    %c0_i32_0 = arith.constant 0 : i32
    %c0_i32_1 = arith.constant 0 : i32
    return %c0_i32, %c0_i32_0 : i32, i32
  }
  func.func @transform_2(%arg0: i32) -> (i32, i32, i32) {
    %c0_i32 = arith.constant 0 : i32
    %c0_i32_0 = arith.constant 0 : i32
    %c0_i32_1 = arith.constant 0 : i32
    %c0_i32_2 = arith.constant 0 : i32
    return %c0_i32, %c0_i32_0, %c0_i32_1 : i32, i32, i32
  }
  func.func @transform_3(%arg0: i32) -> (i32, i32) {
    %c0_i32 = arith.constant 0 : i32
    %c0_i32_0 = arith.constant 0 : i32
    %c0_i32_1 = arith.constant 0 : i32
    return %c0_i32, %c0_i32_0 : i32, i32
  }
  func.func @transform_4(%arg0: i32) -> (i32, i32) {
    %c0_i32 = arith.constant 0 : i32
    %c0_i32_0 = arith.constant 0 : i32
    return %arg0, %c0_i32 : i32, i32
  }
}

</mosaic_0001>

<llo_original>
// kernel: encoder_forward.1
$region0: #{encoder_forward.1}
  #allocation0 [shape = 'u32[]', space=smem, size = 0x4, offset = 0x4, fixed_abs, tag = 'smem constant byte address 0x4 - core index']
  #allocation1 [shape = 'u32[144,128]{1,0:T(1,128)}', space=vmem, size = 0x12000, scoped, tag = 'internal scratch']
  %s0 = inlined_call_operand.vmem [shape: f32[8,361], index: 0, kind: input, shape index: {}]
  %s1 = inlined_call_operand.vmem [shape: bf16[361,128], index: 1, kind: input, shape index: {}]
  %s2 = inlined_call_operand.vmem [shape: bf16[3,128,128], index: 2, kind: input, shape index: {}]
  %s3 = inlined_call_operand.vmem [shape: f32[8,128], index: 3, kind: input, shape index: {}]
  %s4 = inlined_call_operand.vmem [shape: f32[8,128], index: 4, kind: output, shape index: {}]
  %s5 = sld [smem:[#allocation0]]
  $region26: #{encoder_forward.1} parent=0
    _
  %s7 = ssub.s32 1, %s5
  %s8 = scalar_select 0, %s7, %s5
  // Predicated region
  $region2: #{encoder_forward.1} parent=0 // pred_check
    _
  $region3: #{encoder_forward.1} parent=0 // pred_check_branch
    %10 = sbr.rel (0) target = $region5
  $region4: #{encoder_forward.1} parent=0 // pred_region
    _
  $region5: #{encoder_forward.1} parent=0 // pred_fallthru
    _
  // Predicated region
  $region6: #{encoder_forward.1} parent=0 // pred_check
    _
  $region7: #{encoder_forward.1} parent=0 // pred_check_branch
    %12 = sbr.rel (0) target = $region9
  $region8: #{encoder_forward.1} parent=0 // pred_region
    _
  $region9: #{encoder_forward.1} parent=0 // pred_fallthru
    _
  // Predicated region
  $region10: #{encoder_forward.1} parent=0 // pred_check
    _
  $region11: #{encoder_forward.1} parent=0 // pred_check_branch
    %14 = sbr.rel (0) target = $region13
  $region12: #{encoder_forward.1} parent=0 // pred_region
    _
  $region13: #{encoder_forward.1} parent=0 // pred_fallthru
    _
  // Predicated region
  $region14: #{encoder_forward.1} parent=0 // pred_check
    _
  $region15: #{encoder_forward.1} parent=0 // pred_check_branch
    %16 = sbr.rel (0) target = $region17
  $region16: #{encoder_forward.1} parent=0 // pred_region
    _
  $region17: #{encoder_forward.1} parent=0 // pred_fallthru
    _
  %v18 = vld [vmem:[%s3] sm:$0xff]
  %v19 = vld [vmem:[%s0] sm:$0xff]
  %v20 = vld [vmem:[%s0 + $0x8] sm:$0xff]
  %v21 = vld [vmem:[%s0 + $0x10] sm:$0xff]
  %v22 = vpack.c.bf16 %v19, %v19
  %v23 = vpack.c.bf16 %v20, %v20
  %v24 = vpack.c.bf16 %v21, %v21
  %v25 = vld [vmem:[%s1] sm:$0xf]
  %v26 = vld [vmem:[%s1 + $0x4] sm:$0xf]
  %v27 = vld [vmem:[%s1 + $0x8] sm:$0xf]
  %v28 = vld [vmem:[%s1 + $0xc] sm:$0xf]
  %v29 = vld [vmem:[%s1 + $0x10] sm:$0xf]
  %v30 = vld [vmem:[%s1 + $0x14] sm:$0xf]
  %v31 = vld [vmem:[%s1 + $0x18] sm:$0xf]
  %v32 = vld [vmem:[%s1 + $0x1c] sm:$0xf]
  %v33 = vld [vmem:[%s1 + $0x20] sm:$0xf]
  %v34 = vld [vmem:[%s1 + $0x24] sm:$0xf]
  %v35 = vld [vmem:[%s1 + $0x28] sm:$0xf]
  %v36 = vld [vmem:[%s1 + $0x2c] sm:$0xf]
  %v37 = vld [vmem:[%s1 + $0x30] sm:$0xf]
  %v38 = vld [vmem:[%s1 + $0x34] sm:$0xf]
  %v39 = vld [vmem:[%s1 + $0x38] sm:$0xf]
  %v40 = vld [vmem:[%s1 + $0x3c] sm:$0xf]
  %v41 = vld [vmem:[%s1 + $0x40] sm:$0xf]
  %v42 = vld [vmem:[%s1 + $0x44] sm:$0xf]
  %v43 = vld [vmem:[%s1 + $0x48] sm:$0xf]
  %v44 = vld [vmem:[%s1 + $0x4c] sm:$0xf]
  %v45 = vld [vmem:[%s1 + $0x50] sm:$0xf]
  %v46 = vld [vmem:[%s1 + $0x54] sm:$0xf]
  %v47 = vld [vmem:[%s1 + $0x58] sm:$0xf]
  %v48 = vld [vmem:[%s1 + $0x5c] sm:$0xf]
  %v49 = vld [vmem:[%s1 + $0x60] sm:$0xf]
  %v50 = vld [vmem:[%s1 + $0x64] sm:$0xf]
  %v51 = vld [vmem:[%s1 + $0x68] sm:$0xf]
  %v52 = vld [vmem:[%s1 + $0x6c] sm:$0xf]
  %v53 = vld [vmem:[%s1 + $0x70] sm:$0xf]
  %v54 = vld [vmem:[%s1 + $0x74] sm:$0xf]
  %v55 = vld [vmem:[%s1 + $0x78] sm:$0xf]
  %v56 = vld [vmem:[%s1 + $0x7c] sm:$0xf]
  %v57 = vld [vmem:[%s1 + $0x80] sm:$0xf]
  %v58 = vld [vmem:[%s1 + $0x84] sm:$0xf]
  %v59 = vld [vmem:[%s1 + $0x88] sm:$0xf]
  %v60 = vld [vmem:[%s1 + $0x8c] sm:$0xf]
  %v61 = vld [vmem:[%s1 + $0x90] sm:$0xf]
  %v62 = vld [vmem:[%s1 + $0x94] sm:$0xf]
  %v63 = vld [vmem:[%s1 + $0x98] sm:$0xf]
  %v64 = vld [vmem:[%s1 + $0x9c] sm:$0xf]
  %v65 = vld [vmem:[%s1 + $0xa0] sm:$0xf]
  %v66 = vld [vmem:[%s1 + $0xa4] sm:$0xf]
  %v67 = vld [vmem:[%s1 + $0xa8] sm:$0xf]
  %v68 = vld [vmem:[%s1 + $0xac] sm:$0xf]
  %v69 = vld [vmem:[%s1 + $0xb0] sm:$0xf]
  %v70 = vld [vmem:[%s1 + $0xb4] sm:$0x1]
  %v71 = vlaneseq
  %v72 = vshrl.u32 %v71, 7
  %v73 = vsub.s32 0, %v72
  %v74 = vrot.slane %v18, %v73
  %v121 = vunpack.c.l.b16 %v25
  %v122 = vunpack.c.l.b16 %v26
  %v123 = vunpack.c.l.b16 %v27
  %v124 = vunpack.c.l.b16 %v28
  %v125 = vunpack.c.l.b16 %v29
  %v126 = vunpack.c.l.b16 %v30
  %v127 = vunpack.c.l.b16 %v31
  %v128 = vunpack.c.l.b16 %v32
  %v129 = vunpack.c.l.b16 %v33
  %v130 = vunpack.c.l.b16 %v34
  %v131 = vunpack.c.l.b16 %v35
  %v132 = vunpack.c.l.b16 %v36
  %v133 = vunpack.c.l.b16 %v37
  %v134 = vunpack.c.l.b16 %v38
  %v135 = vunpack.c.l.b16 %v39
  %v136 = vunpack.c.l.b16 %v40
  %v137 = vunpack.c.l.b16 %v41
  %v138 = vunpack.c.l.b16 %v42
  %v139 = vunpack.c.l.b16 %v43
  %v140 = vunpack.c.l.b16 %v44
  %v141 = vunpack.c.l.b16 %v45
  %v142 = vunpack.c.l.b16 %v46
  %v143 = vunpack.c.l.b16 %v47
  %v144 = vunpack.c.l.b16 %v48
  %v145 = vunpack.c.l.b16 %v49
  %v146 = vunpack.c.l.b16 %v50
  %v147 = vunpack.c.l.b16 %v51
  %v148 = vunpack.c.l.b16 %v52
  %v149 = vunpack.c.l.b16 %v53
  %v150 = vunpack.c.l.b16 %v54
  %v151 = vunpack.c.l.b16 %v55
  %v152 = vunpack.c.l.b16 %v56
  %v153 = vunpack.c.l.b16 %v57
  %v154 = vunpack.c.l.b16 %v58
  %v155 = vunpack.c.l.b16 %v59
  %v156 = vunpack.c.l.b16 %v60
  %v157 = vunpack.c.l.b16 %v61
  %v158 = vunpack.c.l.b16 %v62
  %v159 = vunpack.c.l.b16 %v63
  %v160 = vunpack.c.l.b16 %v64
  %v161 = vunpack.c.l.b16 %v65
  %v162 = vunpack.c.l.b16 %v66
  %v163 = vunpack.c.l.b16 %v67
  %v164 = vunpack.c.l.b16 %v68
  %v165 = vunpack.c.l.b16 %v69
  %v166 = vunpack.c.l.b16 %v70
  %v167 = vpack.c.b16 %v122, %v121
  %v168 = vpack.c.b16 %v124, %v123
  %v169 = vpack.c.b16 %v126, %v125
  %v170 = vpack.c.b16 %v128, %v127
  %v171 = vpack.c.b16 %v130, %v129
  %v172 = vpack.c.b16 %v132, %v131
  %v173 = vpack.c.b16 %v134, %v133
  %v174 = vpack.c.b16 %v136, %v135
  %v175 = vpack.c.b16 %v138, %v137
  %v176 = vpack.c.b16 %v140, %v139
  %v177 = vpack.c.b16 %v142, %v141
  %v178 = vpack.c.b16 %v144, %v143
  %v179 = vpack.c.b16 %v146, %v145
  %v180 = vpack.c.b16 %v148, %v147
  %v181 = vpack.c.b16 %v150, %v149
  %v182 = vpack.c.b16 %v152, %v151
  %v183 = vpack.c.b16 %v154, %v153
  %v184 = vpack.c.b16 %v156, %v155
  %v185 = vpack.c.b16 %v158, %v157
  %v186 = vpack.c.b16 %v160, %v159
  %v187 = vpack.c.b16 %v162, %v161
  %v188 = vpack.c.b16 %v164, %v163
  %v189 = vpack.c.b16 %v166, %v165
  %vm212 = vcmask 859136
  %v214 = vsel %vm212, %v24, 0
  %vm216 = vcmask 1043456
  %vm217 = vcmask 1044480
  %v218 = vsel %vm216, 4294967295, 65535
  %v219 = vsel %vm217, %v218, 0
  %v221 = vand.u32 %v189, %v219
  %223 = vmatprep.subr.bf16.mxu0 0
  %224 = vmatpush1.bf16.msra.mxu0 %v174
  %225 = vmatprep.subr.bf16.mxu0 0
  %226 = vmatpush1.bf16.msra.mxu0 %v173
  %227 = vmatprep.subr.bf16.mxu0 0
  %228 = vmatpush1.bf16.msra.mxu0 %v172
  %229 = vmatprep.subr.bf16.mxu0 0
  %230 = vmatpush1.bf16.msra.mxu0 %v171
  %231 = vmatprep.subr.bf16.mxu0 0
  %232 = vmatpush1.bf16.msra.mxu0 %v170
  %233 = vmatprep.subr.bf16.mxu0 0
  %234 = vmatpush1.bf16.msra.mxu0 %v169
  %235 = vmatprep.subr.bf16.mxu0 0
  %236 = vmatpush1.bf16.msra.mxu0 %v168
  %237 = vmatprep.subr.bf16.mxu0 0
  %238 = vmatpush1.bf16.msra.mxu0 %v167
  %239 = vmatprep.subr.bf16.mxu0 0
  %240 = vmatpush2.bf16.msra.mxu0 %v182
  %241 = vmatprep.subr.bf16.mxu0 0
  %242 = vmatpush2.bf16.msra.mxu0 %v181
  %243 = vmatprep.subr.bf16.mxu0 0
  %244 = vmatpush2.bf16.msra.mxu0 %v180
  %245 = vmatprep.subr.bf16.mxu0 0
  %246 = vmatpush2.bf16.msra.mxu0 %v179
  %247 = vmatprep.subr.bf16.mxu0 0
  %248 = vmatpush2.bf16.msra.mxu0 %v178
  %249 = vmatprep.subr.bf16.mxu0 0
  %250 = vmatpush2.bf16.msra.mxu0 %v177
  %251 = vmatprep.subr.bf16.mxu0 0
  %252 = vmatpush2.bf16.msra.mxu0 %v176
  %253 = vmatprep.subr.bf16.mxu0 0
  %254 = vmatpush2.bf16.msra.mxu0 %v175
  %255 = vmatprep.mubr.bf16.mxu0 %v23
  %256 = vmatmul.mubr.bf16.gmra.mxu0 %v22
  %v257 = vpop.f32.mrf.mxu0
  %v258 = vadd.f32 %v74, %v257
  %v259 = vpop.f32.mrf.mxu0
  %v260 = vpop.f32.mrf.mxu0
  %v261 = vpop.f32.mrf.mxu0
  %262 = vdwg.mxu0
  %263 = vmatprep.subr.bf16.mxu0 0
  %264 = vmatpush1.bf16.msra.mxu0 0
  %265 = vmatprep.subr.bf16.mxu0 0
  %266 = vmatpush1.bf16.msra.mxu0 %v221
  %267 = vmatprep.subr.bf16.mxu0 0
  %268 = vmatpush1.bf16.msra.mxu0 %v188
  %269 = vmatprep.subr.bf16.mxu0 0
  %270 = vmatpush1.bf16.msra.mxu0 %v187
  %271 = vmatprep.subr.bf16.mxu0 0
  %272 = vmatpush1.bf16.msra.mxu0 %v186
  %273 = vmatprep.subr.bf16.mxu0 0
  %274 = vmatpush1.bf16.msra.mxu0 %v185
  %275 = vmatprep.subr.bf16.mxu0 0
  %276 = vmatpush1.bf16.msra.mxu0 %v184
  %277 = vmatprep.subr.bf16.mxu0 0
  %278 = vmatpush1.bf16.msra.mxu0 %v183
  %279 = vmatprep.subr.bf16.mxu0 0
  %280 = vmatpush2.bf16.msra.mxu0 0
  %281 = vmatprep.subr.bf16.mxu0 0
  %282 = vmatpush2.bf16.msra.mxu0 0
  %283 = vmatprep.subr.bf16.mxu0 0
  %284 = vmatpush2.bf16.msra.mxu0 0
  %285 = vmatprep.subr.bf16.mxu0 0
  %286 = vmatpush2.bf16.msra.mxu0 0
  %287 = vmatprep.subr.bf16.mxu0 0
  %288 = vmatpush2.bf16.msra.mxu0 0
  %289 = vmatprep.subr.bf16.mxu0 0
  %290 = vmatpush2.bf16.msra.mxu0 0
  %291 = vmatprep.subr.bf16.mxu0 0
  %292 = vmatpush2.bf16.msra.mxu0 0
  %293 = vmatprep.subr.bf16.mxu0 0
  %294 = vmatpush2.bf16.msra.mxu0 0
  %295 = vmatprep.mubr.bf16.mxu0 0
  %296 = vmatmul.mubr.bf16.gmra.mxu0 %v214
  %v297 = vpop.f32.mrf.mxu0
  %v298 = vadd.f32 %v258, %v297
  %v299 = vpop.f32.mrf.mxu0
  %v300 = vpop.f32.mrf.mxu0
  %v301 = vpop.f32.mrf.mxu0
  %302 = vdwg.mxu0
  %v303 = vmul.f32 %v298, 3.0
  %v304 = vmin.f32 %v303, 20.0
  %v305 = vmul.f32 %v304, 1.442695
  %v306 = vpow.pop %v305
  %v307 = vadd.f32 %v306, 1.0
  %v308 = vlog2.pop %v307
  %v309 = vmul.f32 %v308, 0.6931472
  %v310 = vmul.f32 -0.5, %v306
  %v311 = vadd.f32 %v310, 1.0
  %v312 = vmul.f32 %v311, %v306
  %v313 = vand.u32 2147483647, %v306
  %vm314 = vcmp.lt.f32.partialorder %v313, 0.0004427343
  %v315 = vsel %vm314, %v312, %v309
  %v316 = vmul.f32 %v315, 0.33333334
  %vm317 = vcmp.gt.f32.partialorder %v303, 20.0
  %v318 = vsel %vm317, %v298, %v316
  %v319 = vpack.c.bf16 %v318, %v318
  %v320 = vld [vmem:[%s2] sm:$0xf]
  %v321 = vld [vmem:[%s2 + $0x4] sm:$0xf]
  %v322 = vld [vmem:[%s2 + $0x8] sm:$0xf]
  %v323 = vld [vmem:[%s2 + $0xc] sm:$0xf]
  %v324 = vld [vmem:[%s2 + $0x10] sm:$0xf]
  %v325 = vld [vmem:[%s2 + $0x14] sm:$0xf]
  %v326 = vld [vmem:[%s2 + $0x18] sm:$0xf]
  %v327 = vld [vmem:[%s2 + $0x1c] sm:$0xf]
  %v328 = vld [vmem:[%s2 + $0x20] sm:$0xf]
  %v329 = vld [vmem:[%s2 + $0x24] sm:$0xf]
  %v330 = vld [vmem:[%s2 + $0x28] sm:$0xf]
  %v331 = vld [vmem:[%s2 + $0x2c] sm:$0xf]
  %v332 = vld [vmem:[%s2 + $0x30] sm:$0xf]
  %v333 = vld [vmem:[%s2 + $0x34] sm:$0xf]
  %v334 = vld [vmem:[%s2 + $0x38] sm:$0xf]
  %v335 = vld [vmem:[%s2 + $0x3c] sm:$0xf]
  %v336 = vlaneseq
  %v337 = vshrl.u32 %v336, 7
  %v338 = vsub.s32 1, %v337
  %v339 = vrot.slane %v18, %v338
  %v356 = vunpack.c.l.b16 %v320
  %v357 = vunpack.c.l.b16 %v321
  %v358 = vunpack.c.l.b16 %v322
  %v359 = vunpack.c.l.b16 %v323
  %v360 = vunpack.c.l.b16 %v324
  %v361 = vunpack.c.l.b16 %v325
  %v362 = vunpack.c.l.b16 %v326
  %v363 = vunpack.c.l.b16 %v327
  %v364 = vunpack.c.l.b16 %v328
  %v365 = vunpack.c.l.b16 %v329
  %v366 = vunpack.c.l.b16 %v330
  %v367 = vunpack.c.l.b16 %v331
  %v368 = vunpack.c.l.b16 %v332
  %v369 = vunpack.c.l.b16 %v333
  %v370 = vunpack.c.l.b16 %v334
  %v371 = vunpack.c.l.b16 %v335
  %v372 = vpack.c.b16 %v357, %v356
  %v373 = vpack.c.b16 %v359, %v358
  %v374 = vpack.c.b16 %v361, %v360
  %v375 = vpack.c.b16 %v363, %v362
  %v376 = vpack.c.b16 %v365, %v364
  %v377 = vpack.c.b16 %v367, %v366
  %v378 = vpack.c.b16 %v369, %v368
  %v379 = vpack.c.b16 %v371, %v370
  %388 = vmatprep.subr.bf16.mxu0 0
  %389 = vmatpush1.bf16.msra.mxu0 %v379
  %390 = vmatprep.subr.bf16.mxu0 0
  %391 = vmatpush1.bf16.msra.mxu0 %v378
  %392 = vmatprep.subr.bf16.mxu0 0
  %393 = vmatpush1.bf16.msra.mxu0 %v377
  %394 = vmatprep.subr.bf16.mxu0 0
  %395 = vmatpush1.bf16.msra.mxu0 %v376
  %396 = vmatprep.subr.bf16.mxu0 0
  %397 = vmatpush1.bf16.msra.mxu0 %v375
  %398 = vmatprep.subr.bf16.mxu0 0
  %399 = vmatpush1.bf16.msra.mxu0 %v374
  %400 = vmatprep.subr.bf16.mxu0 0
  %401 = vmatpush1.bf16.msra.mxu0 %v373
  %402 = vmatprep.subr.bf16.mxu0 0
  %403 = vmatpush1.bf16.msra.mxu0 %v372
  %404 = vmatprep.subr.bf16.mxu0 0
  %405 = vmatpush2.bf16.msra.mxu0 0
  %406 = vmatprep.subr.bf16.mxu0 0
  %407 = vmatpush2.bf16.msra.mxu0 0
  %408 = vmatprep.subr.bf16.mxu0 0
  %409 = vmatpush2.bf16.msra.mxu0 0
  %410 = vmatprep.subr.bf16.mxu0 0
  %411 = vmatpush2.bf16.msra.mxu0 0
  %412 = vmatprep.subr.bf16.mxu0 0
  %413 = vmatpush2.bf16.msra.mxu0 0
  %414 = vmatprep.subr.bf16.mxu0 0
  %415 = vmatpush2.bf16.msra.mxu0 0
  %416 = vmatprep.subr.bf16.mxu0 0
  %417 = vmatpush2.bf16.msra.mxu0 0
  %418 = vmatprep.subr.bf16.mxu0 0
  %419 = vmatpush2.bf16.msra.mxu0 0
  %420 = vmatprep.mubr.bf16.mxu0 0
  %421 = vmatmul.mubr.bf16.gmra.mxu0 %v319
  %v422 = vpop.f32.mrf.mxu0
  %v423 = vadd.f32 %v339, %v422
  %v424 = vpop.f32.mrf.mxu0
  %v425 = vpop.f32.mrf.mxu0
  %v426 = vpop.f32.mrf.mxu0
  %427 = vdwg.mxu0
  %v428 = vmul.f32 %v423, 3.0
  %v429 = vmin.f32 %v428, 20.0
  %v430 = vmul.f32 %v429, 1.442695
  %v431 = vpow.pop %v430
  %v432 = vadd.f32 %v431, 1.0
  %v433 = vlog2.pop %v432
  %v434 = vmul.f32 %v433, 0.6931472
  %v435 = vmul.f32 -0.5, %v431
  %v436 = vadd.f32 %v435, 1.0
  %v437 = vmul.f32 %v436, %v431
  %v438 = vand.u32 2147483647, %v431
  %vm439 = vcmp.lt.f32.partialorder %v438, 0.0004427343
  %v440 = vsel %vm439, %v437, %v434
  %v441 = vmul.f32 %v440, 0.33333334
  %vm442 = vcmp.gt.f32.partialorder %v428, 20.0
  %v443 = vsel %vm442, %v423, %v441
  %v444 = vpack.c.bf16 %v443, %v443
  %s445 = scalar_lea.vmem %s2, 64
  %v446 = vld [vmem:[%s445] sm:$0xf]
  %v447 = vld [vmem:[%s445 + $0x4] sm:$0xf]
  %v448 = vld [vmem:[%s445 + $0x8] sm:$0xf]
  %v449 = vld [vmem:[%s445 + $0xc] sm:$0xf]
  %v450 = vld [vmem:[%s445 + $0x10] sm:$0xf]
  %v451 = vld [vmem:[%s445 + $0x14] sm:$0xf]
  %v452 = vld [vmem:[%s445 + $0x18] sm:$0xf]
  %v453 = vld [vmem:[%s445 + $0x1c] sm:$0xf]
  %v454 = vld [vmem:[%s445 + $0x20] sm:$0xf]
  %v455 = vld [vmem:[%s445 + $0x24] sm:$0xf]
  %v456 = vld [vmem:[%s445 + $0x28] sm:$0xf]
  %v457 = vld [vmem:[%s445 + $0x2c] sm:$0xf]
  %v458 = vld [vmem:[%s445 + $0x30] sm:$0xf]
  %v459 = vld [vmem:[%s445 + $0x34] sm:$0xf]
  %v460 = vld [vmem:[%s445 + $0x38] sm:$0xf]
  %v461 = vld [vmem:[%s445 + $0x3c] sm:$0xf]
  %v462 = vlaneseq
  %v463 = vshrl.u32 %v462, 7
  %v464 = vsub.s32 2, %v463
  %v465 = vrot.slane %v18, %v464
  %v482 = vunpack.c.l.b16 %v446
  %v483 = vunpack.c.l.b16 %v447
  %v484 = vunpack.c.l.b16 %v448
  %v485 = vunpack.c.l.b16 %v449
  %v486 = vunpack.c.l.b16 %v450
  %v487 = vunpack.c.l.b16 %v451
  %v488 = vunpack.c.l.b16 %v452
  %v489 = vunpack.c.l.b16 %v453
  %v490 = vunpack.c.l.b16 %v454
  %v491 = vunpack.c.l.b16 %v455
  %v492 = vunpack.c.l.b16 %v456
  %v493 = vunpack.c.l.b16 %v457
  %v494 = vunpack.c.l.b16 %v458
  %v495 = vunpack.c.l.b16 %v459
  %v496 = vunpack.c.l.b16 %v460
  %v497 = vunpack.c.l.b16 %v461
  %v498 = vpack.c.b16 %v483, %v482
  %v499 = vpack.c.b16 %v485, %v484
  %v500 = vpack.c.b16 %v487, %v486
  %v501 = vpack.c.b16 %v489, %v488
  %v502 = vpack.c.b16 %v491, %v490
  %v503 = vpack.c.b16 %v493, %v492
  %v504 = vpack.c.b16 %v495, %v494
  %v505 = vpack.c.b16 %v497, %v496
  %514 = vmatprep.subr.bf16.mxu0 0
  %515 = vmatpush1.bf16.msra.mxu0 %v505
  %516 = vmatprep.subr.bf16.mxu0 0
  %517 = vmatpush1.bf16.msra.mxu0 %v504
  %518 = vmatprep.subr.bf16.mxu0 0
  %519 = vmatpush1.bf16.msra.mxu0 %v503
  %520 = vmatprep.subr.bf16.mxu0 0
  %521 = vmatpush1.bf16.msra.mxu0 %v502
  %522 = vmatprep.subr.bf16.mxu0 0
  %523 = vmatpush1.bf16.msra.mxu0 %v501
  %524 = vmatprep.subr.bf16.mxu0 0
  %525 = vmatpush1.bf16.msra.mxu0 %v500
  %526 = vmatprep.subr.bf16.mxu0 0
  %527 = vmatpush1.bf16.msra.mxu0 %v499
  %528 = vmatprep.subr.bf16.mxu0 0
  %529 = vmatpush1.bf16.msra.mxu0 %v498
  %530 = vmatprep.subr.bf16.mxu0 0
  %531 = vmatpush2.bf16.msra.mxu0 0
  %532 = vmatprep.subr.bf16.mxu0 0
  %533 = vmatpush2.bf16.msra.mxu0 0
  %534 = vmatprep.subr.bf16.mxu0 0
  %535 = vmatpush2.bf16.msra.mxu0 0
  %536 = vmatprep.subr.bf16.mxu0 0
  %537 = vmatpush2.bf16.msra.mxu0 0
  %538 = vmatprep.subr.bf16.mxu0 0
  %539 = vmatpush2.bf16.msra.mxu0 0
  %540 = vmatprep.subr.bf16.mxu0 0
  %541 = vmatpush2.bf16.msra.mxu0 0
  %542 = vmatprep.subr.bf16.mxu0 0
  %543 = vmatpush2.bf16.msra.mxu0 0
  %544 = vmatprep.subr.bf16.mxu0 0
  %545 = vmatpush2.bf16.msra.mxu0 0
  %546 = vmatprep.mubr.bf16.mxu0 0
  %547 = vmatmul.mubr.bf16.gmra.mxu0 %v444
  %v548 = vpop.f32.mrf.mxu0
  %v549 = vadd.f32 %v465, %v548
  %v550 = vpop.f32.mrf.mxu0
  %v551 = vpop.f32.mrf.mxu0
  %v552 = vpop.f32.mrf.mxu0
  %553 = vdwg.mxu0
  %v554 = vmul.f32 %v549, 3.0
  %v555 = vmin.f32 %v554, 20.0
  %v556 = vmul.f32 %v555, 1.442695
  %v557 = vpow.pop %v556
  %v558 = vadd.f32 %v557, 1.0
  %v559 = vlog2.pop %v558
  %v560 = vmul.f32 %v559, 0.6931472
  %v561 = vmul.f32 -0.5, %v557
  %v562 = vadd.f32 %v561, 1.0
  %v563 = vmul.f32 %v562, %v557
  %v564 = vand.u32 2147483647, %v557
  %vm565 = vcmp.lt.f32.partialorder %v564, 0.0004427343
  %v566 = vsel %vm565, %v563, %v560
  %v567 = vmul.f32 %v566, 0.33333334
  %vm568 = vcmp.gt.f32.partialorder %v554, 20.0
  %v569 = vsel %vm568, %v549, %v567
  %v570 = vpack.c.bf16 %v569, %v569
  %s571 = scalar_lea.vmem %s2, 128
  %v572 = vld [vmem:[%s571] sm:$0xf]
  %v573 = vld [vmem:[%s571 + $0x4] sm:$0xf]
  %v574 = vld [vmem:[%s571 + $0x8] sm:$0xf]
  %v575 = vld [vmem:[%s571 + $0xc] sm:$0xf]
  %v576 = vld [vmem:[%s571 + $0x10] sm:$0xf]
  %v577 = vld [vmem:[%s571 + $0x14] sm:$0xf]
  %v578 = vld [vmem:[%s571 + $0x18] sm:$0xf]
  %v579 = vld [vmem:[%s571 + $0x1c] sm:$0xf]
  %v580 = vld [vmem:[%s571 + $0x20] sm:$0xf]
  %v581 = vld [vmem:[%s571 + $0x24] sm:$0xf]
  %v582 = vld [vmem:[%s571 + $0x28] sm:$0xf]
  %v583 = vld [vmem:[%s571 + $0x2c] sm:$0xf]
  %v584 = vld [vmem:[%s571 + $0x30] sm:$0xf]
  %v585 = vld [vmem:[%s571 + $0x34] sm:$0xf]
  %v586 = vld [vmem:[%s571 + $0x38] sm:$0xf]
  %v587 = vld [vmem:[%s571 + $0x3c] sm:$0xf]
  %v588 = vlaneseq
  %v589 = vshrl.u32 %v588, 7
  %v590 = vsub.s32 3, %v589
  %v591 = vrot.slane %v18, %v590
  %v608 = vunpack.c.l.b16 %v572
  %v609 = vunpack.c.l.b16 %v573
  %v610 = vunpack.c.l.b16 %v574
  %v611 = vunpack.c.l.b16 %v575
  %v612 = vunpack.c.l.b16 %v576
  %v613 = vunpack.c.l.b16 %v577
  %v614 = vunpack.c.l.b16 %v578
  %v615 = vunpack.c.l.b16 %v579
  %v616 = vunpack.c.l.b16 %v580
  %v617 = vunpack.c.l.b16 %v581
  %v618 = vunpack.c.l.b16 %v582
  %v619 = vunpack.c.l.b16 %v583
  %v620 = vunpack.c.l.b16 %v584
  %v621 = vunpack.c.l.b16 %v585
  %v622 = vunpack.c.l.b16 %v586
  %v623 = vunpack.c.l.b16 %v587
  %v624 = vpack.c.b16 %v609, %v608
  %v625 = vpack.c.b16 %v611, %v610
  %v626 = vpack.c.b16 %v613, %v612
  %v627 = vpack.c.b16 %v615, %v614
  %v628 = vpack.c.b16 %v617, %v616
  %v629 = vpack.c.b16 %v619, %v618
  %v630 = vpack.c.b16 %v621, %v620
  %v631 = vpack.c.b16 %v623, %v622
  %640 = vmatprep.subr.bf16.mxu0 0
  %641 = vmatpush1.bf16.msra.mxu0 %v631
  %642 = vmatprep.subr.bf16.mxu0 0
  %643 = vmatpush1.bf16.msra.mxu0 %v630
  %644 = vmatprep.subr.bf16.mxu0 0
  %645 = vmatpush1.bf16.msra.mxu0 %v629
  %646 = vmatprep.subr.bf16.mxu0 0
  %647 = vmatpush1.bf16.msra.mxu0 %v628
  %648 = vmatprep.subr.bf16.mxu0 0
  %649 = vmatpush1.bf16.msra.mxu0 %v627
  %650 = vmatprep.subr.bf16.mxu0 0
  %651 = vmatpush1.bf16.msra.mxu0 %v626
  %652 = vmatprep.subr.bf16.mxu0 0
  %653 = vmatpush1.bf16.msra.mxu0 %v625
  %654 = vmatprep.subr.bf16.mxu0 0
  %655 = vmatpush1.bf16.msra.mxu0 %v624
  %656 = vmatprep.subr.bf16.mxu0 0
  %657 = vmatpush2.bf16.msra.mxu0 0
  %658 = vmatprep.subr.bf16.mxu0 0
  %659 = vmatpush2.bf16.msra.mxu0 0
  %660 = vmatprep.subr.bf16.mxu0 0
  %661 = vmatpush2.bf16.msra.mxu0 0
  %662 = vmatprep.subr.bf16.mxu0 0
  %663 = vmatpush2.bf16.msra.mxu0 0
  %664 = vmatprep.subr.bf16.mxu0 0
  %665 = vmatpush2.bf16.msra.mxu0 0
  %666 = vmatprep.subr.bf16.mxu0 0
  %667 = vmatpush2.bf16.msra.mxu0 0
  %668 = vmatprep.subr.bf16.mxu0 0
  %669 = vmatpush2.bf16.msra.mxu0 0
  %670 = vmatprep.subr.bf16.mxu0 0
  %671 = vmatpush2.bf16.msra.mxu0 0
  %672 = vmatprep.mubr.bf16.mxu0 0
  %673 = vmatmul.mubr.bf16.gmra.mxu0 %v570
  %v674 = vpop.f32.mrf.mxu0
  %v675 = vadd.f32 %v591, %v674
  %v676 = vpop.f32.mrf.mxu0
  %v677 = vpop.f32.mrf.mxu0
  %v678 = vpop.f32.mrf.mxu0
  %679 = vdwg.mxu0
  %680 = vst [vmem:[%s4] sm:$0xff] %v675
  // Predicated region
  $region18: #{encoder_forward.1} parent=0 // pred_check
    _
  $region19: #{encoder_forward.1} parent=0 // pred_check_branch
    %682 = sbr.rel (0) target = $region21
  $region20: #{encoder_forward.1} parent=0 // pred_region
    _
  $region21: #{encoder_forward.1} parent=0 // pred_fallthru
    _
  // Predicated region
  $region22: #{encoder_forward.1} parent=0 // pred_check
    _
  $region23: #{encoder_forward.1} parent=0 // pred_check_branch
    %684 = sbr.rel (0) target = $region25
  $region24: #{encoder_forward.1} parent=0 // pred_region
    _
  $region25: #{encoder_forward.1} parent=0 // pred_fallthru
    _

</llo_original>
